<compile_context>
chip_gen: v6e
topology: v6e:2x2x1
jax: 0.10.0
libtpu: 0.0.40
codegen_flags: <defaults>
</compile_context>

<pallas_src>
import math
from functools import partial

import jax
import jax.numpy as jnp
from jax import lax
from jax.experimental import pallas as pl
from jax.experimental.pallas import tpu as pltpu

BATCH     = 2
NODES     = 8                     # nodes == dynamic_nodes
DIM       = 25                    # forced by split([24,1]) + LayerNorm([dim])
HEADS     = 4
OUT_DIM   = 4
NEIGHBORS = 2
D         = HEADS * OUT_DIM       # 16
CHUNK     = math.ceil(NODES / 2)  # chunk size used inside AdaptiveGraphLearning
LN_EPS    = 1e-5

assert CHUNK >= OUT_DIM           # required for torch's einsum('bhnd,bhdu->bhnu') validity
assert NEIGHBORS <= CHUNK


def _round_up(x, m):
    return (x + m - 1) // m * m


def _slab_a_offsets(batch):
    """Row offsets inside the DIM-lane parameter slab."""
    rows = batch * NODES
    e_off, eg_off = 0, rows
    lng_off, lnb_off = 2 * rows, 2 * rows + 1
    w2_off = _round_up(2 * rows + 2, 8)          # keep the matmul operand sublane-aligned
    return e_off, eg_off, lng_off, lnb_off, w2_off, w2_off + DIM


# slab B (lane width = 2*D) row offsets
WQK_OFF     = 0
BQK_OFF     = DIM
MLPB_OFF    = DIM + 1
WEXP_OFF    = _round_up(DIM + 2, 8)              # aligned multi-row block
SLAB_B_ROWS = WEXP_OFF + HEADS


def _ln(x, gamma, beta):
    mu = jnp.mean(x, axis=-1, keepdims=True)
    var = jnp.mean((x - mu) ** 2, axis=-1, keepdims=True)
    return (x - mu) * lax.rsqrt(var + LN_EPS) * gamma + beta


def _graph_kernel(incre, batch, inp_ref, sa_ref, sb_ref, out_ref):
    rows = batch * NODES
    e_off, eg_off, lng_off, lnb_off, w2_off, _ = _slab_a_offsets(batch)

    g   = sa_ref[lng_off:lng_off + 1, :]          # time_norm gamma (1, DIM)
    bta = sa_ref[lnb_off:lnb_off + 1, :]          # time_norm beta  (1, DIM)
    raw = inp_ref[...]                            # (rows, DIM) -- all batches stacked

    # time_norm(part2_incre) residual, then time_norm again (incre path)
    if incre:
        col = lax.broadcasted_iota(jnp.int32, (rows, DIM), 1)
        x  = jnp.where(col < DIM - 1, raw, 0.0)              # zero out the last column
        p2 = jnp.where(col == 0, raw[:, DIM - 1:DIM], 0.0)   # column 24 moved to column 0
        node_input = _ln(x + _ln(p2, g, bta), g, bta)
    else:
        node_input = _ln(raw, g, bta)

    e_t  = sa_ref[e_off:e_off + rows, :]          # nodevec_static, tiled over batch
    eg_t = sa_ref[eg_off:eg_off + rows, :]        # e @ gf_w1 + gf_b (hoisted), tiled
    gfw2 = sa_ref[w2_off:w2_off + DIM, :]         # (DIM, DIM)

    # gate_Fusion_1(batch, nodevec_static, node_input) + nodevec_static
    z = jax.nn.sigmoid(
        eg_t + jnp.dot(node_input, gfw2, preferred_element_type=jnp.float32))
    nodevec = z * e_t + (1.0 - z) * node_input + e_t           # (rows, DIM)

    # fused query|key projection: a single (DIM, 2D) matmul
    wqk = sb_ref[WQK_OFF:WQK_OFF + DIM, :]         # (DIM, 2D)
    bqk = sb_ref[BQK_OFF:BQK_OFF + 1, :]           # (1, 2D)
    qk = jnp.dot(nodevec, wqk, preferred_element_type=jnp.float32) + bqk   # (rows, 2D)

    wexp = sb_ref[WEXP_OFF:WEXP_OFF + HEADS, 0:D]          # mlp_w expanded: (HEADS, D)
    mlpb = sb_ref[MLPB_OFF:MLPB_OFF + 1, 0:HEADS * CHUNK]  # mlp bias repeated per chunk col

    inv_sqrt = 1.0 / math.sqrt(OUT_DIM)
    scores_parts = []
    for b in range(batch):                         # tiny, static -> unrolled at trace time
        q_b = qk[b * NODES:(b + 1) * NODES, 0:D]              # (NODES, D)
        k_b = qk[b * NODES:b * NODES + CHUNK, D:2 * D]        # (CHUNK, D) -- first key chunk

        # sum over heads of the raw attention == full contraction over D
        resid = lax.dot_general(q_b, k_b, (((1,), (1,)), ((), ())),
                                preferred_element_type=jnp.float32) * inv_sqrt  # (N, CHUNK)

        # 1x1 conv over heads folded into the key matrix:
        #   conv[h](n,u) = q_b[n,:] . (mlp_w[h, j//OUT_DIM] * k_b[u,:]) / sqrt(d) + mlp_b[h]
        k_tilde = jnp.concatenate(
            [k_b * wexp[h:h + 1, :] for h in range(HEADS)], axis=0)   # (HEADS*CHUNK, D)
        conv = lax.dot_general(q_b, k_tilde, (((1,), (1,)), ((), ())),
                               preferred_element_type=jnp.float32) * inv_sqrt + mlpb
        conv = jnp.maximum(conv, 0.0)                                  # (N, HEADS*CHUNK)

        relu_sum = conv[:, 0:CHUNK]
        for h in range(1, HEADS):
            relu_sum = relu_sum + conv[:, h * CHUNK:(h + 1) * CHUNK]
        scores_parts.append(relu_sum + resid)                          # (N, CHUNK)

    scores = jnp.concatenate(scores_parts, axis=0)                     # (rows, CHUNK)

    # top-k (largest, distinct indices) along the chunk axis; non-selected entries -> 0
    colc = lax.broadcasted_iota(jnp.int32, (rows, CHUNK), 1)
    sel = jnp.zeros((rows, CHUNK), dtype=jnp.bool_)
    for _ in range(NEIGHBORS):
        cur = jnp.where(sel, -jnp.inf, scores)
        m = jnp.max(cur, axis=-1, keepdims=True)
        idx = jnp.min(jnp.where(cur == m, colc, CHUNK), axis=-1, keepdims=True)
        sel = jnp.logical_or(sel, colc == idx)
    out_ref[...] = jnp.where(sel, scores, 0.0)


def make_params(key):
    ks = jax.random.split(key, 9)

    def xavier(k, shape):
        a = math.sqrt(6.0 / (shape[0] + shape[1]))
        return jax.random.uniform(k, shape, jnp.float32, -a, a)

    def kaiming_like(k, fan_in, shape):
        a = 1.0 / math.sqrt(fan_in)
        return jax.random.uniform(k, shape, jnp.float32, -a, a)

    return dict(
        emb=jax.random.normal(ks[0], (NODES, DIM), jnp.float32),     # nn.Embedding(nodes, dim)
        ln_g=jnp.ones((1, DIM), jnp.float32),                        # time_norm LayerNorm([dim])
        ln_b=jnp.zeros((1, DIM), jnp.float32),
        gf_w1=xavier(ks[1], (DIM, DIM)),                             # gatedFusion_1
        gf_w2=xavier(ks[2], (DIM, DIM)),
        gf_b=jnp.zeros((1, DIM), jnp.float32),
        wq=kaiming_like(ks[3], DIM, (DIM, D)),                       # query Linear (transposed)
        bq=kaiming_like(ks[4], DIM, (1, D)),
        wk=kaiming_like(ks[5], DIM, (DIM, D)),                       # key Linear (transposed)
        bk=kaiming_like(ks[6], DIM, (1, D)),
        mlp_w=kaiming_like(ks[7], HEADS, (HEADS, HEADS)),            # 1x1 Conv2d weight
        mlp_b=kaiming_like(ks[8], HEADS, (HEADS,)),                  # 1x1 Conv2d bias
    )


@partial(jax.jit, static_argnames=("incre",))
def incremental_graph_constructor(inp, P, incre=True):
    B = inp.shape[0]
    assert inp.shape[1] == NODES and inp.shape[2] == DIM
    rows = B * NODES
    x = inp.reshape(rows, DIM)                    # all row-wise ops vectorize over batch

    e_off, eg_off, lng_off, lnb_off, w2_off, a_rows = _slab_a_offsets(B)

    # Hoisted batch-invariant gate term, plus parameter packing into two VMEM slabs.
    e = P['emb']
    e_gate = e @ P['gf_w1'] + P['gf_b']                              # (NODES, DIM)
    slab_a = jnp.zeros((a_rows, DIM), jnp.float32)
    slab_a = slab_a.at[e_off:e_off + rows].set(jnp.tile(e, (B, 1)))
    slab_a = slab_a.at[eg_off:eg_off + rows].set(jnp.tile(e_gate, (B, 1)))
    slab_a = slab_a.at[lng_off].set(P['ln_g'][0])
    slab_a = slab_a.at[lnb_off].set(P['ln_b'][0])
    slab_a = slab_a.at[w2_off:w2_off + DIM].set(P['gf_w2'])

    wqk = jnp.concatenate([P['wq'], P['wk']], axis=1)                # (DIM, 2D)
    bqk = jnp.concatenate([P['bq'], P['bk']], axis=1)                # (1, 2D)
    wexp = jnp.repeat(P['mlp_w'], OUT_DIM, axis=1)                   # (HEADS, D)
    mlpb = jnp.repeat(P['mlp_b'], CHUNK)                             # (HEADS*CHUNK,)
    slab_b = jnp.zeros((SLAB_B_ROWS, 2 * D), jnp.float32)
    slab_b = slab_b.at[WQK_OFF:WQK_OFF + DIM].set(wqk)
    slab_b = slab_b.at[BQK_OFF].set(bqk[0])
    slab_b = slab_b.at[MLPB_OFF, 0:HEADS * CHUNK].set(mlpb)
    slab_b = slab_b.at[WEXP_OFF:WEXP_OFF + HEADS, 0:D].set(wexp)

    vmem = pl.BlockSpec(memory_space=pltpu.MemorySpace.VMEM)
    kept = pl.pallas_call(
        partial(_graph_kernel, incre, B),
        out_shape=jax.ShapeDtypeStruct((rows, CHUNK), jnp.float32),
        in_specs=[vmem, vmem, vmem],
        out_specs=vmem,
    )(x, slab_a, slab_b)

    # Scatter target has NODES columns; the top-k indices live in [0, CHUNK).
    return jnp.pad(kept, ((0, 0), (0, NODES - CHUNK))).reshape(B, NODES, NODES)


def reference_forward(inp, P, incre=True):
    """Pure-JAX reference with identical math (sanity check)."""
    B = inp.shape[0]
    ln = lambda v: _ln(v, P['ln_g'], P['ln_b'])
    if incre:
        x = jnp.concatenate([inp[:, :, :24],
                             jnp.zeros((B, NODES, DIM - 24), jnp.float32)], axis=2)
        p2 = jnp.concatenate([inp[:, :, 24:25],
                              jnp.zeros((B, NODES, DIM - 1), jnp.float32)], axis=2)
        node_input = ln(x + ln(p2))
    else:
        node_input = ln(inp)
    e = P['emb']
    z = jax.nn.sigmoid(e @ P['gf_w1'] + node_input @ P['gf_w2'] + P['gf_b'])
    nv = z * e + (1.0 - z) * node_input + e
    q = (nv @ P['wq'] + P['bq']).reshape(B, NODES, HEADS, OUT_DIM)
    k = (nv @ P['wk'] + P['bk']).reshape(B, NODES, HEADS, OUT_DIM)
    attn = jnp.einsum('bnhd,buhd->bhnu', q, k[:, :CHUNK]) / math.sqrt(OUT_DIM)
    conv = jnp.einsum('oi,binu->bonu', P['mlp_w'], attn) + P['mlp_b'][None, :, None, None]
    attn = jax.nn.relu(conv) + attn
    scores = attn.sum(axis=1)                              # (B, N, CHUNK)
    vals, idxs = lax.top_k(scores, NEIGHBORS)
    adj = jnp.einsum('bnk,bnkc->bnc', vals,
                     jax.nn.one_hot(idxs, NODES, dtype=jnp.float32))
    return adj


if __name__ == "__main__":
    key = jax.random.PRNGKey(0)
    k_in, k_par = jax.random.split(key)
    P = make_params(k_par)
    inp = jax.random.normal(k_in, (BATCH, NODES, DIM), jnp.float32)

    out = incremental_graph_constructor(inp, P, incre=True)
    out = jax.block_until_ready(out)

    ref = reference_forward(inp, P, incre=True)
    err = float(jnp.max(jnp.abs(out - ref)))
    assert out.shape == (BATCH, NODES, NODES)
    assert jnp.allclose(out, ref, atol=1e-2, rtol=1e-2), err
    print("KERNEL_OK")
</pallas_src>

<mosaic_0001>
module attributes {stable_mosaic.version = 11 : i64} {
  func.func @_graph_kernel(%arg0: memref<16x25xf32, #tpu.memory_space<vmem>>, %arg1: memref<65x25xf32, #tpu.memory_space<vmem>>, %arg2: memref<36x32xf32, #tpu.memory_space<vmem>>, %arg3: memref<16x4xf32, #tpu.memory_space<vmem>>) attributes {dimension_semantics = [], scalar_prefetch = 0 : i64, scratch_operands = 0 : i64, tpu.core_type = #tpu.core_type<tc>} {
    %c32 = arith.constant 32 : index
    %c0 = arith.constant 0 : index
    %0 = vector.load %arg1[%c32, %c0] : memref<65x25xf32, #tpu.memory_space<vmem>>, vector<1x25xf32>
    %c33 = arith.constant 33 : index
    %c0_0 = arith.constant 0 : index
    %1 = vector.load %arg1[%c33, %c0_0] : memref<65x25xf32, #tpu.memory_space<vmem>>, vector<1x25xf32>
    %c0_1 = arith.constant 0 : index
    %c0_2 = arith.constant 0 : index
    %2 = vector.load %arg0[%c0_1, %c0_2] : memref<16x25xf32, #tpu.memory_space<vmem>>, vector<16x25xf32>
    %3 = tpu.iota {dimensions = array<i32: 1>} : vector<16x25xi32>
    %c24_i32 = arith.constant 24 : i32
    %4 = vector.broadcast %c24_i32 : i32 to vector<16x25xi32>
    %5 = arith.cmpi slt, %3, %4 : vector<16x25xi32>
    %cst = arith.constant 0.000000e+00 : f32
    %6 = vector.broadcast %cst : f32 to vector<16x25xf32>
    %7 = arith.select %5, %2, %6 : vector<16x25xi1>, vector<16x25xf32>
    %c0_i32 = arith.constant 0 : i32
    %8 = vector.broadcast %c0_i32 : i32 to vector<16x25xi32>
    %9 = arith.cmpi eq, %3, %8 : vector<16x25xi32>
    %10 = vector.extract_strided_slice %2 {offsets = [0, 24], sizes = [16, 1], strides = [1, 1]} : vector<16x25xf32> to vector<16x1xf32>
    %cst_3 = arith.constant 0.000000e+00 : f32
    %11 = vector.shape_cast %10 : vector<16x1xf32> to vector<16x1xf32>
    %12 = vector.broadcast %11 : vector<16x1xf32> to vector<16x25xf32>
    %13 = vector.broadcast %cst_3 : f32 to vector<16x25xf32>
    %14 = arith.select %9, %12, %13 : vector<16x25xi1>, vector<16x25xf32>
    %cst_4 = arith.constant dense<0.000000e+00> : vector<16xf32>
    %15 = vector.multi_reduction <add>, %14, %cst_4 [1] : vector<16x25xf32> to vector<16xf32>
    %16 = vector.shape_cast %15 : vector<16xf32> to vector<16x1xf32>
    %cst_5 = arith.constant 2.500000e+01 : f32
    %17 = vector.broadcast %cst_5 : f32 to vector<16x1xf32>
    %18 = arith.divf %16, %17 : vector<16x1xf32>
    %19 = vector.broadcast %18 : vector<16x1xf32> to vector<16x25xf32>
    %20 = arith.subf %14, %19 : vector<16x25xf32>
    %21 = arith.mulf %20, %20 : vector<16x25xf32>
    %cst_6 = arith.constant dense<0.000000e+00> : vector<16xf32>
    %22 = vector.multi_reduction <add>, %21, %cst_6 [1] : vector<16x25xf32> to vector<16xf32>
    %23 = vector.shape_cast %22 : vector<16xf32> to vector<16x1xf32>
    %cst_7 = arith.constant 2.500000e+01 : f32
    %24 = vector.broadcast %cst_7 : f32 to vector<16x1xf32>
    %25 = arith.divf %23, %24 : vector<16x1xf32>
    %26 = vector.broadcast %18 : vector<16x1xf32> to vector<16x25xf32>
    %27 = arith.subf %14, %26 : vector<16x25xf32>
    %cst_8 = arith.constant 9.99999974E-6 : f32
    %28 = vector.broadcast %cst_8 : f32 to vector<16x1xf32>
    %29 = arith.addf %25, %28 : vector<16x1xf32>
    %30 = math.rsqrt %29 : vector<16x1xf32>
    %31 = vector.broadcast %30 : vector<16x1xf32> to vector<16x25xf32>
    %32 = arith.mulf %27, %31 : vector<16x25xf32>
    %33 = vector.broadcast %0 : vector<1x25xf32> to vector<16x25xf32>
    %34 = arith.mulf %32, %33 : vector<16x25xf32>
    %35 = vector.broadcast %1 : vector<1x25xf32> to vector<16x25xf32>
    %36 = arith.addf %34, %35 : vector<16x25xf32>
    %37 = arith.addf %7, %36 : vector<16x25xf32>
    %cst_9 = arith.constant dense<0.000000e+00> : vector<16xf32>
    %38 = vector.multi_reduction <add>, %37, %cst_9 [1] : vector<16x25xf32> to vector<16xf32>
    %39 = vector.shape_cast %38 : vector<16xf32> to vector<16x1xf32>
    %cst_10 = arith.constant 2.500000e+01 : f32
    %40 = vector.broadcast %cst_10 : f32 to vector<16x1xf32>
    %41 = arith.divf %39, %40 : vector<16x1xf32>
    %42 = vector.broadcast %41 : vector<16x1xf32> to vector<16x25xf32>
    %43 = arith.subf %37, %42 : vector<16x25xf32>
    %44 = arith.mulf %43, %43 : vector<16x25xf32>
    %cst_11 = arith.constant dense<0.000000e+00> : vector<16xf32>
    %45 = vector.multi_reduction <add>, %44, %cst_11 [1] : vector<16x25xf32> to vector<16xf32>
    %46 = vector.shape_cast %45 : vector<16xf32> to vector<16x1xf32>
    %cst_12 = arith.constant 2.500000e+01 : f32
    %47 = vector.broadcast %cst_12 : f32 to vector<16x1xf32>
    %48 = arith.divf %46, %47 : vector<16x1xf32>
    %49 = vector.broadcast %41 : vector<16x1xf32> to vector<16x25xf32>
    %50 = arith.subf %37, %49 : vector<16x25xf32>
    %cst_13 = arith.constant 9.99999974E-6 : f32
    %51 = vector.broadcast %cst_13 : f32 to vector<16x1xf32>
    %52 = arith.addf %48, %51 : vector<16x1xf32>
    %53 = math.rsqrt %52 : vector<16x1xf32>
    %54 = vector.broadcast %53 : vector<16x1xf32> to vector<16x25xf32>
    %55 = arith.mulf %50, %54 : vector<16x25xf32>
    %56 = vector.broadcast %0 : vector<1x25xf32> to vector<16x25xf32>
    %57 = arith.mulf %55, %56 : vector<16x25xf32>
    %58 = vector.broadcast %1 : vector<1x25xf32> to vector<16x25xf32>
    %59 = arith.addf %57, %58 : vector<16x25xf32>
    %c0_14 = arith.constant 0 : index
    %c0_15 = arith.constant 0 : index
    %60 = vector.load %arg1[%c0_14, %c0_15] : memref<65x25xf32, #tpu.memory_space<vmem>>, vector<16x25xf32>
    %c16 = arith.constant 16 : index
    %c0_16 = arith.constant 0 : index
    %61 = vector.load %arg1[%c16, %c0_16] : memref<65x25xf32, #tpu.memory_space<vmem>>, vector<16x25xf32>
    %c40 = arith.constant 40 : index
    %c0_17 = arith.constant 0 : index
    %62 = vector.load %arg1[%c40, %c0_17] : memref<65x25xf32, #tpu.memory_space<vmem>>, vector<25x25xf32>
    %cst_18 = arith.constant dense<0.000000e+00> : vector<16x25xf32>
    %63 = tpu.matmul %59, %62, %cst_18 {dimension_numbers = #tpu.dot_dimension_numbers<[1], [0], [0], [1], [0, 0, 1, 1], [], []>} : vector<16x25xf32>, vector<25x25xf32>, vector<16x25xf32> -> vector<16x25xf32>
    %64 = arith.addf %61, %63 : vector<16x25xf32>
    %65 = arith.negf %64 : vector<16x25xf32>
    %66 = math.exp %65 : vector<16x25xf32>
    %cst_19 = arith.constant 1.000000e+00 : f32
    %67 = vector.broadcast %cst_19 : f32 to vector<16x25xf32>
    %68 = arith.addf %67, %66 : vector<16x25xf32>
    %69 = arith.divf %67, %68 : vector<16x25xf32>
    %70 = arith.mulf %69, %60 : vector<16x25xf32>
    %cst_20 = arith.constant 1.000000e+00 : f32
    %71 = vector.broadcast %cst_20 : f32 to vector<16x25xf32>
    %72 = arith.subf %71, %69 : vector<16x25xf32>
    %73 = arith.mulf %72, %59 : vector<16x25xf32>
    %74 = arith.addf %70, %73 : vector<16x25xf32>
    %75 = arith.addf %74, %60 : vector<16x25xf32>
    %c0_21 = arith.constant 0 : index
    %c0_22 = arith.constant 0 : index
    %76 = vector.load %arg2[%c0_21, %c0_22] : memref<36x32xf32, #tpu.memory_space<vmem>>, vector<25x32xf32>
    %c25 = arith.constant 25 : index
    %c0_23 = arith.constant 0 : index
    %77 = vector.load %arg2[%c25, %c0_23] : memref<36x32xf32, #tpu.memory_space<vmem>>, vector<1x32xf32>
    %cst_24 = arith.constant dense<0.000000e+00> : vector<16x32xf32>
    %78 = tpu.matmul %75, %76, %cst_24 {dimension_numbers = #tpu.dot_dimension_numbers<[1], [0], [0], [1], [0, 0, 1, 1], [], []>} : vector<16x25xf32>, vector<25x32xf32>, vector<16x32xf32> -> vector<16x32xf32>
    %79 = vector.broadcast %77 : vector<1x32xf32> to vector<16x32xf32>
    %80 = arith.addf %78, %79 : vector<16x32xf32>
    %c32_25 = arith.constant 32 : index
    %c0_26 = arith.constant 0 : index
    %81 = vector.load %arg2[%c32_25, %c0_26] : memref<36x32xf32, #tpu.memory_space<vmem>>, vector<4x16xf32>
    %c26 = arith.constant 26 : index
    %c0_27 = arith.constant 0 : index
    %82 = vector.load %arg2[%c26, %c0_27] : memref<36x32xf32, #tpu.memory_space<vmem>>, vector<1x16xf32>
    %83 = vector.extract_strided_slice %80 {offsets = [0, 0], sizes = [8, 16], strides = [1, 1]} : vector<16x32xf32> to vector<8x16xf32>
    %84 = vector.extract_strided_slice %80 {offsets = [0, 16], sizes = [4, 16], strides = [1, 1]} : vector<16x32xf32> to vector<4x16xf32>
    %cst_28 = arith.constant dense<0.000000e+00> : vector<8x4xf32>
    %85 = tpu.matmul %83, %84, %cst_28 {dimension_numbers = #tpu.dot_dimension_numbers<[1], [1], [0], [0], [0, 0, 1, 0], [], []>} : vector<8x16xf32>, vector<4x16xf32>, vector<8x4xf32> -> vector<8x4xf32>
    %cst_29 = arith.constant 5.000000e-01 : f32
    %86 = vector.broadcast %cst_29 : f32 to vector<8x4xf32>
    %87 = arith.mulf %85, %86 : vector<8x4xf32>
    %88 = vector.extract_strided_slice %81 {offsets = [0, 0], sizes = [1, 16], strides = [1, 1]} : vector<4x16xf32> to vector<1x16xf32>
    %89 = vector.broadcast %88 : vector<1x16xf32> to vector<4x16xf32>
    %90 = arith.mulf %84, %89 : vector<4x16xf32>
    %91 = vector.extract_strided_slice %81 {offsets = [1, 0], sizes = [1, 16], strides = [1, 1]} : vector<4x16xf32> to vector<1x16xf32>
    %92 = vector.broadcast %91 : vector<1x16xf32> to vector<4x16xf32>
    %93 = arith.mulf %84, %92 : vector<4x16xf32>
    %94 = vector.extract_strided_slice %81 {offsets = [2, 0], sizes = [1, 16], strides = [1, 1]} : vector<4x16xf32> to vector<1x16xf32>
    %95 = vector.broadcast %94 : vector<1x16xf32> to vector<4x16xf32>
    %96 = arith.mulf %84, %95 : vector<4x16xf32>
    %97 = vector.extract_strided_slice %81 {offsets = [3, 0], sizes = [1, 16], strides = [1, 1]} : vector<4x16xf32> to vector<1x16xf32>
    %98 = vector.broadcast %97 : vector<1x16xf32> to vector<4x16xf32>
    %99 = arith.mulf %84, %98 : vector<4x16xf32>
    %100 = tpu.concatenate %90, %93, %96, %99 in 0 : vector<4x16xf32>, vector<4x16xf32>, vector<4x16xf32>, vector<4x16xf32> -> vector<16x16xf32>
    %cst_30 = arith.constant dense<0.000000e+00> : vector<8x16xf32>
    %101 = tpu.matmul %83, %100, %cst_30 {dimension_numbers = #tpu.dot_dimension_numbers<[1], [1], [0], [0], [0, 0, 1, 0], [], []>} : vector<8x16xf32>, vector<16x16xf32>, vector<8x16xf32> -> vector<8x16xf32>
    %cst_31 = arith.constant 5.000000e-01 : f32
    %102 = vector.broadcast %cst_31 : f32 to vector<8x16xf32>
    %103 = arith.mulf %101, %102 : vector<8x16xf32>
    %104 = vector.broadcast %82 : vector<1x16xf32> to vector<8x16xf32>
    %105 = arith.addf %103, %104 : vector<8x16xf32>
    %cst_32 = arith.constant 0.000000e+00 : f32
    %106 = vector.broadcast %cst_32 : f32 to vector<8x16xf32>
    %107 = arith.maximumf %105, %106 : vector<8x16xf32>
    %108 = vector.extract_strided_slice %107 {offsets = [0, 0], sizes = [8, 4], strides = [1, 1]} : vector<8x16xf32> to vector<8x4xf32>
    %109 = vector.extract_strided_slice %107 {offsets = [0, 4], sizes = [8, 4], strides = [1, 1]} : vector<8x16xf32> to vector<8x4xf32>
    %110 = arith.addf %108, %109 : vector<8x4xf32>
    %111 = vector.extract_strided_slice %107 {offsets = [0, 8], sizes = [8, 4], strides = [1, 1]} : vector<8x16xf32> to vector<8x4xf32>
    %112 = arith.addf %110, %111 : vector<8x4xf32>
    %113 = vector.extract_strided_slice %107 {offsets = [0, 12], sizes = [8, 4], strides = [1, 1]} : vector<8x16xf32> to vector<8x4xf32>
    %114 = arith.addf %112, %113 : vector<8x4xf32>
    %115 = arith.addf %114, %87 : vector<8x4xf32>
    %116 = vector.extract_strided_slice %80 {offsets = [8, 0], sizes = [8, 16], strides = [1, 1]} : vector<16x32xf32> to vector<8x16xf32>
    %117 = vector.extract_strided_slice %80 {offsets = [8, 16], sizes = [4, 16], strides = [1, 1]} : vector<16x32xf32> to vector<4x16xf32>
    %cst_33 = arith.constant dense<0.000000e+00> : vector<8x4xf32>
    %118 = tpu.matmul %116, %117, %cst_33 {dimension_numbers = #tpu.dot_dimension_numbers<[1], [1], [0], [0], [0, 0, 1, 0], [], []>} : vector<8x16xf32>, vector<4x16xf32>, vector<8x4xf32> -> vector<8x4xf32>
    %cst_34 = arith.constant 5.000000e-01 : f32
    %119 = vector.broadcast %cst_34 : f32 to vector<8x4xf32>
    %120 = arith.mulf %118, %119 : vector<8x4xf32>
    %121 = vector.extract_strided_slice %81 {offsets = [0, 0], sizes = [1, 16], strides = [1, 1]} : vector<4x16xf32> to vector<1x16xf32>
    %122 = vector.broadcast %121 : vector<1x16xf32> to vector<4x16xf32>
    %123 = arith.mulf %117, %122 : vector<4x16xf32>
    %124 = vector.extract_strided_slice %81 {offsets = [1, 0], sizes = [1, 16], strides = [1, 1]} : vector<4x16xf32> to vector<1x16xf32>
    %125 = vector.broadcast %124 : vector<1x16xf32> to vector<4x16xf32>
    %126 = arith.mulf %117, %125 : vector<4x16xf32>
    %127 = vector.extract_strided_slice %81 {offsets = [2, 0], sizes = [1, 16], strides = [1, 1]} : vector<4x16xf32> to vector<1x16xf32>
    %128 = vector.broadcast %127 : vector<1x16xf32> to vector<4x16xf32>
    %129 = arith.mulf %117, %128 : vector<4x16xf32>
    %130 = vector.extract_strided_slice %81 {offsets = [3, 0], sizes = [1, 16], strides = [1, 1]} : vector<4x16xf32> to vector<1x16xf32>
    %131 = vector.broadcast %130 : vector<1x16xf32> to vector<4x16xf32>
    %132 = arith.mulf %117, %131 : vector<4x16xf32>
    %133 = tpu.concatenate %123, %126, %129, %132 in 0 : vector<4x16xf32>, vector<4x16xf32>, vector<4x16xf32>, vector<4x16xf32> -> vector<16x16xf32>
    %cst_35 = arith.constant dense<0.000000e+00> : vector<8x16xf32>
    %134 = tpu.matmul %116, %133, %cst_35 {dimension_numbers = #tpu.dot_dimension_numbers<[1], [1], [0], [0], [0, 0, 1, 0], [], []>} : vector<8x16xf32>, vector<16x16xf32>, vector<8x16xf32> -> vector<8x16xf32>
    %cst_36 = arith.constant 5.000000e-01 : f32
    %135 = vector.broadcast %cst_36 : f32 to vector<8x16xf32>
    %136 = arith.mulf %134, %135 : vector<8x16xf32>
    %137 = vector.broadcast %82 : vector<1x16xf32> to vector<8x16xf32>
    %138 = arith.addf %136, %137 : vector<8x16xf32>
    %cst_37 = arith.constant 0.000000e+00 : f32
    %139 = vector.broadcast %cst_37 : f32 to vector<8x16xf32>
    %140 = arith.maximumf %138, %139 : vector<8x16xf32>
    %141 = vector.extract_strided_slice %140 {offsets = [0, 0], sizes = [8, 4], strides = [1, 1]} : vector<8x16xf32> to vector<8x4xf32>
    %142 = vector.extract_strided_slice %140 {offsets = [0, 4], sizes = [8, 4], strides = [1, 1]} : vector<8x16xf32> to vector<8x4xf32>
    %143 = arith.addf %141, %142 : vector<8x4xf32>
    %144 = vector.extract_strided_slice %140 {offsets = [0, 8], sizes = [8, 4], strides = [1, 1]} : vector<8x16xf32> to vector<8x4xf32>
    %145 = arith.addf %143, %144 : vector<8x4xf32>
    %146 = vector.extract_strided_slice %140 {offsets = [0, 12], sizes = [8, 4], strides = [1, 1]} : vector<8x16xf32> to vector<8x4xf32>
    %147 = arith.addf %145, %146 : vector<8x4xf32>
    %148 = arith.addf %147, %120 : vector<8x4xf32>
    %149 = tpu.concatenate %115, %148 in 0 : vector<8x4xf32>, vector<8x4xf32> -> vector<16x4xf32>
    %150 = tpu.iota {dimensions = array<i32: 1>} : vector<16x4xi32>
    %false = arith.constant false
    %151 = vector.broadcast %false : i1 to vector<16x4xi1>
    %cst_38 = arith.constant 0xFF800000 : f32
    %152 = vector.broadcast %cst_38 : f32 to vector<16x4xf32>
    %153 = arith.select %151, %152, %149 : vector<16x4xi1>, vector<16x4xf32>
    %cst_39 = arith.constant dense<0xFF800000> : vector<16xf32>
    %154 = vector.multi_reduction <maximumf>, %153, %cst_39 [1] : vector<16x4xf32> to vector<16xf32>
    %155 = vector.shape_cast %154 : vector<16xf32> to vector<16x1xf32>
    %156 = vector.broadcast %155 : vector<16x1xf32> to vector<16x4xf32>
    %157 = arith.cmpf oeq, %153, %156 : vector<16x4xf32>
    %c4_i32 = arith.constant 4 : i32
    %158 = vector.broadcast %c4_i32 : i32 to vector<16x4xi32>
    %159 = arith.select %157, %150, %158 : vector<16x4xi1>, vector<16x4xi32>
    %cst_40 = arith.constant dense<2147483647> : vector<16xi32>
    %160 = vector.multi_reduction <minsi>, %159, %cst_40 [1] : vector<16x4xi32> to vector<16xi32>
    %161 = vector.shape_cast %160 : vector<16xi32> to vector<16x1xi32>
    %162 = vector.broadcast %161 : vector<16x1xi32> to vector<16x4xi32>
    %163 = arith.cmpi eq, %150, %162 : vector<16x4xi32>
    %164 = arith.ori %151, %163 : vector<16x4xi1>
    %cst_41 = arith.constant 0xFF800000 : f32
    %165 = vector.broadcast %cst_41 : f32 to vector<16x4xf32>
    %166 = arith.select %164, %165, %149 : vector<16x4xi1>, vector<16x4xf32>
    %cst_42 = arith.constant dense<0xFF800000> : vector<16xf32>
    %167 = vector.multi_reduction <maximumf>, %166, %cst_42 [1] : vector<16x4xf32> to vector<16xf32>
    %168 = vector.shape_cast %167 : vector<16xf32> to vector<16x1xf32>
    %169 = vector.broadcast %168 : vector<16x1xf32> to vector<16x4xf32>
    %170 = arith.cmpf oeq, %166, %169 : vector<16x4xf32>
    %c4_i32_43 = arith.constant 4 : i32
    %171 = vector.broadcast %c4_i32_43 : i32 to vector<16x4xi32>
    %172 = arith.select %170, %150, %171 : vector<16x4xi1>, vector<16x4xi32>
    %cst_44 = arith.constant dense<2147483647> : vector<16xi32>
    %173 = vector.multi_reduction <minsi>, %172, %cst_44 [1] : vector<16x4xi32> to vector<16xi32>
    %174 = vector.shape_cast %173 : vector<16xi32> to vector<16x1xi32>
    %175 = vector.broadcast %174 : vector<16x1xi32> to vector<16x4xi32>
    %176 = arith.cmpi eq, %150, %175 : vector<16x4xi32>
    %177 = arith.ori %164, %176 : vector<16x4xi1>
    %cst_45 = arith.constant 0.000000e+00 : f32
    %178 = vector.broadcast %cst_45 : f32 to vector<16x4xf32>
    %179 = arith.select %177, %149, %178 : vector<16x4xi1>, vector<16x4xf32>
    %c0_46 = arith.constant 0 : index
    %c0_47 = arith.constant 0 : index
    %180 = vector.load %arg3[%c0_46, %c0_47] : memref<16x4xf32, #tpu.memory_space<vmem>>, vector<16x4xf32>
    tpu.vector_store %arg3[%c0_46, %c0_47], %179 {strides = array<i32>} : memref<16x4xf32, #tpu.memory_space<vmem>>, vector<16x4xf32>,
    return
  }
}

</mosaic_0001>

<llo_original>
// kernel: incremental_graph_constructor.1
$region0: #{incremental_graph_constructor.1}
  #allocation0 [shape = 'u32[]', space=smem, size = 0x4, offset = 0x4, fixed_abs, tag = 'smem constant byte address 0x4 - core index']
  #allocation1 [shape = 'u32[144,128]{1,0:T(1,128)}', space=vmem, size = 0x12000, scoped, tag = 'internal scratch']
  %s0 = inlined_call_operand.vmem [shape: f32[16,25], index: 0, kind: input, shape index: {}]
  %s1 = inlined_call_operand.vmem [shape: f32[65,25], index: 1, kind: input, shape index: {}]
  %s2 = inlined_call_operand.vmem [shape: f32[36,32], index: 2, kind: input, shape index: {}]
  %s3 = inlined_call_operand.vmem [shape: f32[16,4], index: 3, kind: output, shape index: {}]
  %s4 = sld [smem:[#allocation0]]
  $region22: #{incremental_graph_constructor.1} parent=0
    _
  %s6 = ssub.s32 1, %s4
  %s7 = scalar_select 0, %s6, %s4
  // Predicated region
  $region2: #{incremental_graph_constructor.1} parent=0 // pred_check
    _
  $region3: #{incremental_graph_constructor.1} parent=0 // pred_check_branch
    %9 = sbr.rel (0) target = $region5
  $region4: #{incremental_graph_constructor.1} parent=0 // pred_region
    _
  $region5: #{incremental_graph_constructor.1} parent=0 // pred_fallthru
    _
  // Predicated region
  $region6: #{incremental_graph_constructor.1} parent=0 // pred_check
    _
  $region7: #{incremental_graph_constructor.1} parent=0 // pred_check_branch
    %11 = sbr.rel (0) target = $region9
  $region8: #{incremental_graph_constructor.1} parent=0 // pred_region
    _
  $region9: #{incremental_graph_constructor.1} parent=0 // pred_fallthru
    _
  // Predicated region
  $region10: #{incremental_graph_constructor.1} parent=0 // pred_check
    _
  $region11: #{incremental_graph_constructor.1} parent=0 // pred_check_branch
    %13 = sbr.rel (0) target = $region13
  $region12: #{incremental_graph_constructor.1} parent=0 // pred_region
    _
  $region13: #{incremental_graph_constructor.1} parent=0 // pred_fallthru
    _
  %v14 = vld [vmem:[%s1 + $0x20] sm:$0x1]
  %v15 = vld [vmem:[%s1 + $0x21] sm:$0x1]
  %v16 = vld [vmem:[%s0] sm:$0xff]
  %v17 = vld [vmem:[%s0 + $0x8] sm:$0xff]
  %v18 = vlaneseq
  %v19 = vand.u32 %v18, 127
  %vm20 = vcmp.lt.s32.totalorder %v19, 24
  %v21 = vsel %vm20, %v16, 0.0
  %v22 = vsel %vm20, %v17, 0.0
  %vm23 = vcmp.eq.s32.totalorder %v19, 0
  %25 = vset.pattern.permute.xlu0 24
  %26 = vperm.xlu0 %25, %v16
  %v27 = vpop.permute.xlu0 %26
  %30 = vset.pattern.permute.xlu0 24
  %31 = vperm.xlu0 %30, %v17
  %v32 = vpop.permute.xlu0 %31
  %v34 = vsel %vm23, %v27, 0.0
  %v35 = vsel %vm23, %v32, 0.0
  %vm36 = vcmask 203776
  %v37 = vsel %vm36, %v34, 0.0
  %38 = vadd.xlane.f32.xlu0 %v37
  %v39 = vpop.xlane.xlu0 %38
  %v40 = vsel %vm36, %v35, 0.0
  %41 = vadd.xlane.f32.xlu0 %v40
  %v42 = vpop.xlane.xlu0 %41
  %v43 = vrcp.pop 25.0
  %v44 = vmul.f32 %v39, %v43
  %v45 = vmul.f32 %v42, %v43
  %v46 = vsub.f32 %v34, %v44
  %v47 = vsub.f32 %v35, %v45
  %v48 = vmul.f32 %v46, %v46
  %v49 = vmul.f32 %v47, %v47
  %v50 = vsel %vm36, %v48, 0.0
  %51 = vadd.xlane.f32.xlu0 %v50
  %v52 = vpop.xlane.xlu0 %51
  %v53 = vsel %vm36, %v49, 0.0
  %54 = vadd.xlane.f32.xlu0 %v53
  %v55 = vpop.xlane.xlu0 %54
  %v56 = vmul.f32 %v52, %v43
  %v57 = vmul.f32 %v55, %v43
  %v58 = vadd.f32 %v56, 1e-05
  %v59 = vadd.f32 %v57, 1e-05
  %v60 = vrsqrt.pop %v58
  %v61 = vrsqrt.pop %v59
  %v62 = vmul.f32 %v46, %v60
  %v63 = vmul.f32 %v47, %v61
  %v64 = vlaneseq
  %v65 = vshrl.u32 %v64, 7
  %v66 = vsub.s32 0, %v65
  %v67 = vrot.slane %v14, %v66
  %v68 = vmul.f32 %v62, %v67
  %v69 = vmul.f32 %v63, %v67
  %v70 = vlaneseq
  %v71 = vshrl.u32 %v70, 7
  %v72 = vsub.s32 0, %v71
  %v73 = vrot.slane %v15, %v72
  %v74 = vadd.f32 %v68, %v73
  %v75 = vadd.f32 %v69, %v73
  %v76 = vadd.f32 %v21, %v74
  %v77 = vadd.f32 %v22, %v75
  %v78 = vsel %vm36, %v76, 0.0
  %79 = vadd.xlane.f32.xlu0 %v78
  %v80 = vpop.xlane.xlu0 %79
  %v81 = vsel %vm36, %v77, 0.0
  %82 = vadd.xlane.f32.xlu0 %v81
  %v83 = vpop.xlane.xlu0 %82
  %v84 = vmul.f32 %v80, %v43
  %v85 = vmul.f32 %v83, %v43
  %v86 = vsub.f32 %v76, %v84
  %v87 = vsub.f32 %v77, %v85
  %v88 = vmul.f32 %v86, %v86
  %v89 = vmul.f32 %v87, %v87
  %v90 = vsel %vm36, %v88, 0.0
  %91 = vadd.xlane.f32.xlu0 %v90
  %v92 = vpop.xlane.xlu0 %91
  %v93 = vsel %vm36, %v89, 0.0
  %94 = vadd.xlane.f32.xlu0 %v93
  %v95 = vpop.xlane.xlu0 %94
  %v96 = vmul.f32 %v92, %v43
  %v97 = vmul.f32 %v95, %v43
  %v98 = vadd.f32 %v96, 1e-05
  %v99 = vadd.f32 %v97, 1e-05
  %v100 = vrsqrt.pop %v98
  %v101 = vrsqrt.pop %v99
  %v102 = vmul.f32 %v86, %v100
  %v103 = vmul.f32 %v87, %v101
  %v104 = vmul.f32 %v102, %v67
  %v105 = vmul.f32 %v103, %v67
  %v106 = vadd.f32 %v104, %v73
  %v107 = vadd.f32 %v105, %v73
  %v108 = vld [vmem:[%s1] sm:$0xff]
  %v109 = vld [vmem:[%s1 + $0x8] sm:$0xff]
  %v110 = vld [vmem:[%s1 + $0x10] sm:$0xff]
  %v111 = vld [vmem:[%s1 + $0x18] sm:$0xff]
  %v112 = vld [vmem:[%s1 + $0x28] sm:$0xff]
  %v113 = vld [vmem:[%s1 + $0x30] sm:$0xff]
  %v114 = vld [vmem:[%s1 + $0x38] sm:$0xff]
  %v115 = vld [vmem:[%s1 + $0x40] sm:$0x1]
  %v117 = vsel %vm36, %v106, 0
  %v120 = vsel %vm36, %v107, 0
  %vm122 = vcmask 1040384
  %v124 = vsel %vm122, %v115, 0
  %126 = vmatprep.subr.mxu0 0.0
  %127 = vmatpush1.msra.mxu0 0.0
  %128 = vmatprep.subr.mxu0 0.0
  %129 = vmatpush1.msra.mxu0 0.0
  %130 = vmatprep.subr.mxu0 0.0
  %131 = vmatpush1.msra.mxu0 0.0
  %132 = vmatprep.subr.mxu0 0.0
  %133 = vmatpush1.msra.mxu0 0.0
  %134 = vmatprep.subr.mxu0 0.0
  %135 = vmatpush1.msra.mxu0 0.0
  %136 = vmatprep.subr.mxu0 0.0
  %137 = vmatpush1.msra.mxu0 0.0
  %138 = vmatprep.subr.mxu0 0.0
  %139 = vmatpush1.msra.mxu0 0.0
  %140 = vmatprep.subr.mxu0 0.0
  %141 = vmatpush1.msra.mxu0 0.0
  %142 = vmatprep.subr.mxu0 0.0
  %143 = vmatpush1.msra.mxu0 0.0
  %144 = vmatprep.subr.mxu0 0.0
  %145 = vmatpush1.msra.mxu0 0.0
  %146 = vmatprep.subr.mxu0 0.0
  %147 = vmatpush1.msra.mxu0 0.0
  %148 = vmatprep.subr.mxu0 0.0
  %149 = vmatpush1.msra.mxu0 0.0
  %150 = vmatprep.subr.mxu0 0.0
  %151 = vmatpush1.msra.mxu0 %v124
  %152 = vmatprep.subr.mxu0 0.0
  %153 = vmatpush1.msra.mxu0 %v114
  %154 = vmatprep.subr.mxu0 0.0
  %155 = vmatpush1.msra.mxu0 %v113
  %156 = vmatprep.subr.mxu0 0.0
  %157 = vmatpush1.msra.mxu0 %v112
  %158 = vmatprep.subr.mxu0 0.0
  %159 = vmatpush2.msra.mxu0 0.0
  %160 = vmatprep.subr.mxu0 0.0
  %161 = vmatpush2.msra.mxu0 0.0
  %162 = vmatprep.subr.mxu0 0.0
  %163 = vmatpush2.msra.mxu0 0.0
  %164 = vmatprep.subr.mxu0 0.0
  %165 = vmatpush2.msra.mxu0 0.0
  %166 = vmatprep.subr.mxu0 0.0
  %167 = vmatpush2.msra.mxu0 0.0
  %168 = vmatprep.subr.mxu0 0.0
  %169 = vmatpush2.msra.mxu0 0.0
  %170 = vmatprep.subr.mxu0 0.0
  %171 = vmatpush2.msra.mxu0 0.0
  %172 = vmatprep.subr.mxu0 0.0
  %173 = vmatpush2.msra.mxu0 0.0
  %174 = vmatprep.subr.mxu0 0.0
  %175 = vmatpush2.msra.mxu0 0.0
  %176 = vmatprep.subr.mxu0 0.0
  %177 = vmatpush2.msra.mxu0 0.0
  %178 = vmatprep.subr.mxu0 0.0
  %179 = vmatpush2.msra.mxu0 0.0
  %180 = vmatprep.subr.mxu0 0.0
  %181 = vmatpush2.msra.mxu0 0.0
  %182 = vmatprep.subr.mxu0 0.0
  %183 = vmatpush2.msra.mxu0 0.0
  %184 = vmatprep.subr.mxu0 0.0
  %185 = vmatpush2.msra.mxu0 0.0
  %186 = vmatprep.subr.mxu0 0.0
  %187 = vmatpush2.msra.mxu0 0.0
  %188 = vmatprep.subr.mxu0 0.0
  %189 = vmatpush2.msra.mxu0 0.0
  %190 = vmatprep.mubr.f32.mxu0 0.0
  %191 = vmatmul.mubr.f32.gmra.mxu0 %v117
  %v192 = vpop.f32.mrf.mxu0
  %v193 = vadd.f32 0.0, %v192
  %v194 = vpop.f32.mrf.mxu0
  %195 = vmatprep.mubr.f32.mxu0 0.0
  %196 = vmatmul.mubr.f32.gmra.mxu0 %v120
  %v197 = vpop.f32.mrf.mxu0
  %v198 = vadd.f32 0.0, %v197
  %v199 = vpop.f32.mrf.mxu0
  %200 = vdwg.mxu0
  %v201 = vadd.f32 %v110, %v193
  %v202 = vadd.f32 %v111, %v198
  %v203 = vxor.u32 %v201, 2147483648
  %v204 = vxor.u32 %v202, 2147483648
  %v205 = vmul.f32 %v203, 1.442695
  %v206 = vpow.pop %v205
  %v207 = vmul.f32 %v204, 1.442695
  %v208 = vpow.pop %v207
  %v209 = vadd.f32 %v206, 1.0
  %v210 = vadd.f32 %v208, 1.0
  %v211 = vrcp.pop %v209
  %v212 = vmul.f32 1.0, %v211
  %v213 = vrcp.pop %v210
  %v214 = vmul.f32 1.0, %v213
  %v215 = vmul.f32 %v212, %v108
  %v216 = vmul.f32 %v214, %v109
  %v217 = vsub.f32 1.0, %v212
  %v218 = vsub.f32 1.0, %v214
  %v219 = vmul.f32 %v217, %v106
  %v220 = vmul.f32 %v218, %v107
  %v221 = vadd.f32 %v215, %v219
  %v222 = vadd.f32 %v216, %v220
  %v223 = vadd.f32 %v221, %v108
  %v224 = vadd.f32 %v222, %v109
  %v225 = vld [vmem:[%s2] sm:$0xff]
  %v226 = vld [vmem:[%s2 + $0x8] sm:$0xff]
  %v227 = vld [vmem:[%s2 + $0x10] sm:$0xff]
  %v228 = vld [vmem:[%s2 + $0x18] sm:$0x1]
  %v229 = vld [vmem:[%s2 + $0x19] sm:$0x1]
  %v230 = vlaneseq
  %v231 = vshrl.u32 %v230, 7
  %v232 = vsub.s32 0, %v231
  %v233 = vrot.slane %v229, %v232
  %v235 = vsel %vm36, %v223, 0
  %v238 = vsel %vm36, %v224, 0
  %v241 = vsel %vm122, %v228, 0
  %243 = vmatprep.subr.mxu0 0.0
  %244 = vmatpush1.msra.mxu0 0.0
  %245 = vmatprep.subr.mxu0 0.0
  %246 = vmatpush1.msra.mxu0 0.0
  %247 = vmatprep.subr.mxu0 0.0
  %248 = vmatpush1.msra.mxu0 0.0
  %249 = vmatprep.subr.mxu0 0.0
  %250 = vmatpush1.msra.mxu0 0.0
  %251 = vmatprep.subr.mxu0 0.0
  %252 = vmatpush1.msra.mxu0 0.0
  %253 = vmatprep.subr.mxu0 0.0
  %254 = vmatpush1.msra.mxu0 0.0
  %255 = vmatprep.subr.mxu0 0.0
  %256 = vmatpush1.msra.mxu0 0.0
  %257 = vmatprep.subr.mxu0 0.0
  %258 = vmatpush1.msra.mxu0 0.0
  %259 = vmatprep.subr.mxu0 0.0
  %260 = vmatpush1.msra.mxu0 0.0
  %261 = vmatprep.subr.mxu0 0.0
  %262 = vmatpush1.msra.mxu0 0.0
  %263 = vmatprep.subr.mxu0 0.0
  %264 = vmatpush1.msra.mxu0 0.0
  %265 = vmatprep.subr.mxu0 0.0
  %266 = vmatpush1.msra.mxu0 0.0
  %267 = vmatprep.subr.mxu0 0.0
  %268 = vmatpush1.msra.mxu0 %v241
  %269 = vmatprep.subr.mxu0 0.0
  %270 = vmatpush1.msra.mxu0 %v227
  %271 = vmatprep.subr.mxu0 0.0
  %272 = vmatpush1.msra.mxu0 %v226
  %273 = vmatprep.subr.mxu0 0.0
  %274 = vmatpush1.msra.mxu0 %v225
  %275 = vmatprep.subr.mxu0 0.0
  %276 = vmatpush2.msra.mxu0 0.0
  %277 = vmatprep.subr.mxu0 0.0
  %278 = vmatpush2.msra.mxu0 0.0
  %279 = vmatprep.subr.mxu0 0.0
  %280 = vmatpush2.msra.mxu0 0.0
  %281 = vmatprep.subr.mxu0 0.0
  %282 = vmatpush2.msra.mxu0 0.0
  %283 = vmatprep.subr.mxu0 0.0
  %284 = vmatpush2.msra.mxu0 0.0
  %285 = vmatprep.subr.mxu0 0.0
  %286 = vmatpush2.msra.mxu0 0.0
  %287 = vmatprep.subr.mxu0 0.0
  %288 = vmatpush2.msra.mxu0 0.0
  %289 = vmatprep.subr.mxu0 0.0
  %290 = vmatpush2.msra.mxu0 0.0
  %291 = vmatprep.subr.mxu0 0.0
  %292 = vmatpush2.msra.mxu0 0.0
  %293 = vmatprep.subr.mxu0 0.0
  %294 = vmatpush2.msra.mxu0 0.0
  %295 = vmatprep.subr.mxu0 0.0
  %296 = vmatpush2.msra.mxu0 0.0
  %297 = vmatprep.subr.mxu0 0.0
  %298 = vmatpush2.msra.mxu0 0.0
  %299 = vmatprep.subr.mxu0 0.0
  %300 = vmatpush2.msra.mxu0 0.0
  %301 = vmatprep.subr.mxu0 0.0
  %302 = vmatpush2.msra.mxu0 0.0
  %303 = vmatprep.subr.mxu0 0.0
  %304 = vmatpush2.msra.mxu0 0.0
  %305 = vmatprep.subr.mxu0 0.0
  %306 = vmatpush2.msra.mxu0 0.0
  %307 = vmatprep.mubr.f32.mxu0 0.0
  %308 = vmatmul.mubr.f32.gmra.mxu0 %v235
  %v309 = vpop.f32.mrf.mxu0
  %v310 = vadd.f32 %v233, %v309
  %v311 = vpop.f32.mrf.mxu0
  %312 = vmatprep.mubr.f32.mxu0 0.0
  %313 = vmatmul.mubr.f32.gmra.mxu0 %v238
  %v314 = vpop.f32.mrf.mxu0
  %v315 = vadd.f32 %v233, %v314
  %v316 = vpop.f32.mrf.mxu0
  %317 = vdwg.mxu0
  %v318 = vld [vmem:[%s2 + $0x20] sm:$0xf]
  %v319 = vld [vmem:[%s2 + $0x1a] sm:$0x1]
  %321 = vrot.lane.b32.xlu0 %v310, 112
  %v322 = vpop.permute.xlu0 %321
  %vm323 = vcmask 130048
  %v324 = vsel %vm323, %v310, 0
  %v326 = vsel %vm323, %v322, 0
  %328 = vmatprep.subr.mxu0 0.0
  %329 = vmatpush1.xpose.msra.mxu0 0.0
  %330 = vmatprep.subr.mxu0 0.0
  %331 = vmatpush1.xpose.msra.mxu0 0.0
  %332 = vmatprep.subr.mxu0 0.0
  %333 = vmatpush1.xpose.msra.mxu0 0.0
  %334 = vmatprep.subr.mxu0 0.0
  %335 = vmatpush1.xpose.msra.mxu0 0.0
  %336 = vmatprep.subr.mxu0 0.0
  %337 = vmatpush1.xpose.msra.mxu0 0.0
  %338 = vmatprep.subr.mxu0 0.0
  %339 = vmatpush1.xpose.msra.mxu0 0.0
  %340 = vmatprep.subr.mxu0 0.0
  %341 = vmatpush1.xpose.msra.mxu0 0.0
  %342 = vmatprep.subr.mxu0 0.0
  %343 = vmatpush1.xpose.msra.mxu0 0.0
  %344 = vmatprep.subr.mxu0 0.0
  %345 = vmatpush1.xpose.msra.mxu0 0.0
  %346 = vmatprep.subr.mxu0 0.0
  %347 = vmatpush1.xpose.msra.mxu0 0.0
  %348 = vmatprep.subr.mxu0 0.0
  %349 = vmatpush1.xpose.msra.mxu0 0.0
  %350 = vmatprep.subr.mxu0 0.0
  %351 = vmatpush1.xpose.msra.mxu0 0.0
  %352 = vmatprep.subr.mxu0 0.0
  %353 = vmatpush1.xpose.msra.mxu0 0.0
  %354 = vmatprep.subr.mxu0 0.0
  %355 = vmatpush1.xpose.msra.mxu0 0.0
  %356 = vmatprep.subr.mxu0 0.0
  %357 = vmatpush1.xpose.msra.mxu0 0.0
  %358 = vmatprep.subr.mxu0 0.0
  %359 = vmatpush1.xpose.msra.mxu0 %v326
  %360 = vmatprep.subr.mxu0 0.0
  %361 = vmatpush2.xpose.msra.mxu0 0.0
  %362 = vmatprep.subr.mxu0 0.0
  %363 = vmatpush2.xpose.msra.mxu0 0.0
  %364 = vmatprep.subr.mxu0 0.0
  %365 = vmatpush2.xpose.msra.mxu0 0.0
  %366 = vmatprep.subr.mxu0 0.0
  %367 = vmatpush2.xpose.msra.mxu0 0.0
  %368 = vmatprep.subr.mxu0 0.0
  %369 = vmatpush2.xpose.msra.mxu0 0.0
  %370 = vmatprep.subr.mxu0 0.0
  %371 = vmatpush2.xpose.msra.mxu0 0.0
  %372 = vmatprep.subr.mxu0 0.0
  %373 = vmatpush2.xpose.msra.mxu0 0.0
  %374 = vmatprep.subr.mxu0 0.0
  %375 = vmatpush2.xpose.msra.mxu0 0.0
  %376 = vmatprep.subr.mxu0 0.0
  %377 = vmatpush2.xpose.msra.mxu0 0.0
  %378 = vmatprep.subr.mxu0 0.0
  %379 = vmatpush2.xpose.msra.mxu0 0.0
  %380 = vmatprep.subr.mxu0 0.0
  %381 = vmatpush2.xpose.msra.mxu0 0.0
  %382 = vmatprep.subr.mxu0 0.0
  %383 = vmatpush2.xpose.msra.mxu0 0.0
  %384 = vmatprep.subr.mxu0 0.0
  %385 = vmatpush2.xpose.msra.mxu0 0.0
  %386 = vmatprep.subr.mxu0 0.0
  %387 = vmatpush2.xpose.msra.mxu0 0.0
  %388 = vmatprep.subr.mxu0 0.0
  %389 = vmatpush2.xpose.msra.mxu0 0.0
  %390 = vmatprep.subr.mxu0 0.0
  %391 = vmatpush2.xpose.msra.mxu0 0.0
  %392 = vmatprep.mubr.f32.mxu0 0.0
  %393 = vmatmul.mubr.f32.gmra.mxu0 %v324
  %v394 = vpop.f32.mrf.mxu0
  %v395 = vadd.f32 0.0, %v394
  %v396 = vpop.f32.mrf.mxu0
  %397 = vdwg.mxu0
  %v398 = vmul.f32 %v395, 0.5
  %v399 = vlaneseq
  %v400 = vshrl.u32 %v399, 7
  %v401 = vsub.s32 0, %v400
  %v402 = vrot.slane %v318, %v401
  %404 = vrot.lane.b32.xlu0 %v402, 16
  %v405 = vpop.permute.xlu0 %404
  %v407 = vmul.f32 %v310, %v405
  %v408 = vlaneseq
  %v409 = vshrl.u32 %v408, 7
  %v410 = vsub.s32 1, %v409
  %v411 = vrot.slane %v318, %v410
  %413 = vrot.lane.b32.xlu0 %v411, 16
  %v414 = vpop.permute.xlu0 %413
  %v416 = vmul.f32 %v310, %v414
  %v417 = vlaneseq
  %v418 = vshrl.u32 %v417, 7
  %v419 = vsub.s32 2, %v418
  %v420 = vrot.slane %v318, %v419
  %422 = vrot.lane.b32.xlu0 %v420, 16
  %v423 = vpop.permute.xlu0 %422
  %v425 = vmul.f32 %v310, %v423
  %v426 = vlaneseq
  %v427 = vshrl.u32 %v426, 7
  %v428 = vsub.s32 3, %v427
  %v429 = vrot.slane %v318, %v428
  %431 = vrot.lane.b32.xlu0 %v429, 16
  %v432 = vpop.permute.xlu0 %431
  %v434 = vmul.f32 %v310, %v432
  %v436 = vrot.slane %v416, 4
  %v439 = vrot.slane %v434, 4
  %vm441 = vcmask 1043456
  %v442 = vsel %vm441, %v407, %v436
  %v443 = vsel %vm441, %v425, %v439
  %446 = vrot.lane.b32.xlu0 %v442, 112
  %v447 = vpop.permute.xlu0 %446
  %448 = vrot.lane.b32.xlu0 %v443, 112
  %v449 = vpop.permute.xlu0 %448
  %v450 = vsel %vm323, %v447, 0
  %v452 = vsel %vm323, %v449, 0
  %454 = vmatprep.subr.mxu0 0.0
  %455 = vmatpush1.xpose.msra.mxu0 0.0
  %456 = vmatprep.subr.mxu0 0.0
  %457 = vmatpush1.xpose.msra.mxu0 0.0
  %458 = vmatprep.subr.mxu0 0.0
  %459 = vmatpush1.xpose.msra.mxu0 0.0
  %460 = vmatprep.subr.mxu0 0.0
  %461 = vmatpush1.xpose.msra.mxu0 0.0
  %462 = vmatprep.subr.mxu0 0.0
  %463 = vmatpush1.xpose.msra.mxu0 0.0
  %464 = vmatprep.subr.mxu0 0.0
  %465 = vmatpush1.xpose.msra.mxu0 0.0
  %466 = vmatprep.subr.mxu0 0.0
  %467 = vmatpush1.xpose.msra.mxu0 0.0
  %468 = vmatprep.subr.mxu0 0.0
  %469 = vmatpush1.xpose.msra.mxu0 0.0
  %470 = vmatprep.subr.mxu0 0.0
  %471 = vmatpush1.xpose.msra.mxu0 0.0
  %472 = vmatprep.subr.mxu0 0.0
  %473 = vmatpush1.xpose.msra.mxu0 0.0
  %474 = vmatprep.subr.mxu0 0.0
  %475 = vmatpush1.xpose.msra.mxu0 0.0
  %476 = vmatprep.subr.mxu0 0.0
  %477 = vmatpush1.xpose.msra.mxu0 0.0
  %478 = vmatprep.subr.mxu0 0.0
  %479 = vmatpush1.xpose.msra.mxu0 0.0
  %480 = vmatprep.subr.mxu0 0.0
  %481 = vmatpush1.xpose.msra.mxu0 0.0
  %482 = vmatprep.subr.mxu0 0.0
  %483 = vmatpush1.xpose.msra.mxu0 %v452
  %484 = vmatprep.subr.mxu0 0.0
  %485 = vmatpush1.xpose.msra.mxu0 %v450
  %486 = vmatprep.subr.mxu0 0.0
  %487 = vmatpush2.xpose.msra.mxu0 0.0
  %488 = vmatprep.subr.mxu0 0.0
  %489 = vmatpush2.xpose.msra.mxu0 0.0
  %490 = vmatprep.subr.mxu0 0.0
  %491 = vmatpush2.xpose.msra.mxu0 0.0
  %492 = vmatprep.subr.mxu0 0.0
  %493 = vmatpush2.xpose.msra.mxu0 0.0
  %494 = vmatprep.subr.mxu0 0.0
  %495 = vmatpush2.xpose.msra.mxu0 0.0
  %496 = vmatprep.subr.mxu0 0.0
  %497 = vmatpush2.xpose.msra.mxu0 0.0
  %498 = vmatprep.subr.mxu0 0.0
  %499 = vmatpush2.xpose.msra.mxu0 0.0
  %500 = vmatprep.subr.mxu0 0.0
  %501 = vmatpush2.xpose.msra.mxu0 0.0
  %502 = vmatprep.subr.mxu0 0.0
  %503 = vmatpush2.xpose.msra.mxu0 0.0
  %504 = vmatprep.subr.mxu0 0.0
  %505 = vmatpush2.xpose.msra.mxu0 0.0
  %506 = vmatprep.subr.mxu0 0.0
  %507 = vmatpush2.xpose.msra.mxu0 0.0
  %508 = vmatprep.subr.mxu0 0.0
  %509 = vmatpush2.xpose.msra.mxu0 0.0
  %510 = vmatprep.subr.mxu0 0.0
  %511 = vmatpush2.xpose.msra.mxu0 0.0
  %512 = vmatprep.subr.mxu0 0.0
  %513 = vmatpush2.xpose.msra.mxu0 0.0
  %514 = vmatprep.subr.mxu0 0.0
  %515 = vmatpush2.xpose.msra.mxu0 0.0
  %516 = vmatprep.subr.mxu0 0.0
  %517 = vmatpush2.xpose.msra.mxu0 0.0
  %518 = vmatprep.mubr.f32.mxu0 0.0
  %519 = vmatmul.mubr.f32.gmra.mxu0 %v324
  %v520 = vpop.f32.mrf.mxu0
  %v521 = vadd.f32 0.0, %v520
  %v522 = vpop.f32.mrf.mxu0
  %523 = vdwg.mxu0
  %v524 = vmul.f32 %v521, 0.5
  %v525 = vlaneseq
  %v526 = vshrl.u32 %v525, 7
  %v527 = vsub.s32 0, %v526
  %v528 = vrot.slane %v319, %v527
  %v529 = vadd.f32 %v524, %v528
  %v530 = vmax.f32 %v529, 0.0
  %532 = vrot.lane.b32.xlu0 %v530, 124
  %v533 = vpop.permute.xlu0 %532
  %v535 = vadd.f32 %v530, %v533
  %536 = vrot.lane.b32.xlu0 %v530, 120
  %v537 = vpop.permute.xlu0 %536
  %v539 = vadd.f32 %v535, %v537
  %540 = vrot.lane.b32.xlu0 %v530, 116
  %v541 = vpop.permute.xlu0 %540
  %v543 = vadd.f32 %v539, %v541
  %v544 = vadd.f32 %v543, %v398
  %546 = vrot.lane.b32.xlu0 %v315, 112
  %v547 = vpop.permute.xlu0 %546
  %v548 = vsel %vm323, %v315, 0
  %v550 = vsel %vm323, %v547, 0
  %552 = vmatprep.subr.mxu0 0.0
  %553 = vmatpush1.xpose.msra.mxu0 0.0
  %554 = vmatprep.subr.mxu0 0.0
  %555 = vmatpush1.xpose.msra.mxu0 0.0
  %556 = vmatprep.subr.mxu0 0.0
  %557 = vmatpush1.xpose.msra.mxu0 0.0
  %558 = vmatprep.subr.mxu0 0.0
  %559 = vmatpush1.xpose.msra.mxu0 0.0
  %560 = vmatprep.subr.mxu0 0.0
  %561 = vmatpush1.xpose.msra.mxu0 0.0
  %562 = vmatprep.subr.mxu0 0.0
  %563 = vmatpush1.xpose.msra.mxu0 0.0
  %564 = vmatprep.subr.mxu0 0.0
  %565 = vmatpush1.xpose.msra.mxu0 0.0
  %566 = vmatprep.subr.mxu0 0.0
  %567 = vmatpush1.xpose.msra.mxu0 0.0
  %568 = vmatprep.subr.mxu0 0.0
  %569 = vmatpush1.xpose.msra.mxu0 0.0
  %570 = vmatprep.subr.mxu0 0.0
  %571 = vmatpush1.xpose.msra.mxu0 0.0
  %572 = vmatprep.subr.mxu0 0.0
  %573 = vmatpush1.xpose.msra.mxu0 0.0
  %574 = vmatprep.subr.mxu0 0.0
  %575 = vmatpush1.xpose.msra.mxu0 0.0
  %576 = vmatprep.subr.mxu0 0.0
  %577 = vmatpush1.xpose.msra.mxu0 0.0
  %578 = vmatprep.subr.mxu0 0.0
  %579 = vmatpush1.xpose.msra.mxu0 0.0
  %580 = vmatprep.subr.mxu0 0.0
  %581 = vmatpush1.xpose.msra.mxu0 0.0
  %582 = vmatprep.subr.mxu0 0.0
  %583 = vmatpush1.xpose.msra.mxu0 %v550
  %584 = vmatprep.subr.mxu0 0.0
  %585 = vmatpush2.xpose.msra.mxu0 0.0
  %586 = vmatprep.subr.mxu0 0.0
  %587 = vmatpush2.xpose.msra.mxu0 0.0
  %588 = vmatprep.subr.mxu0 0.0
  %589 = vmatpush2.xpose.msra.mxu0 0.0
  %590 = vmatprep.subr.mxu0 0.0
  %591 = vmatpush2.xpose.msra.mxu0 0.0
  %592 = vmatprep.subr.mxu0 0.0
  %593 = vmatpush2.xpose.msra.mxu0 0.0
  %594 = vmatprep.subr.mxu0 0.0
  %595 = vmatpush2.xpose.msra.mxu0 0.0
  %596 = vmatprep.subr.mxu0 0.0
  %597 = vmatpush2.xpose.msra.mxu0 0.0
  %598 = vmatprep.subr.mxu0 0.0
  %599 = vmatpush2.xpose.msra.mxu0 0.0
  %600 = vmatprep.subr.mxu0 0.0
  %601 = vmatpush2.xpose.msra.mxu0 0.0
  %602 = vmatprep.subr.mxu0 0.0
  %603 = vmatpush2.xpose.msra.mxu0 0.0
  %604 = vmatprep.subr.mxu0 0.0
  %605 = vmatpush2.xpose.msra.mxu0 0.0
  %606 = vmatprep.subr.mxu0 0.0
  %607 = vmatpush2.xpose.msra.mxu0 0.0
  %608 = vmatprep.subr.mxu0 0.0
  %609 = vmatpush2.xpose.msra.mxu0 0.0
  %610 = vmatprep.subr.mxu0 0.0
  %611 = vmatpush2.xpose.msra.mxu0 0.0
  %612 = vmatprep.subr.mxu0 0.0
  %613 = vmatpush2.xpose.msra.mxu0 0.0
  %614 = vmatprep.subr.mxu0 0.0
  %615 = vmatpush2.xpose.msra.mxu0 0.0
  %616 = vmatprep.mubr.f32.mxu0 0.0
  %617 = vmatmul.mubr.f32.gmra.mxu0 %v548
  %v618 = vpop.f32.mrf.mxu0
  %v619 = vadd.f32 0.0, %v618
  %v620 = vpop.f32.mrf.mxu0
  %621 = vdwg.mxu0
  %v622 = vmul.f32 %v619, 0.5
  %v623 = vmul.f32 %v315, %v405
  %v624 = vmul.f32 %v315, %v414
  %v625 = vmul.f32 %v315, %v423
  %v626 = vmul.f32 %v315, %v432
  %v628 = vrot.slane %v624, 4
  %v631 = vrot.slane %v626, 4
  %v633 = vsel %vm441, %v623, %v628
  %v634 = vsel %vm441, %v625, %v631
  %637 = vrot.lane.b32.xlu0 %v633, 112
  %v638 = vpop.permute.xlu0 %637
  %639 = vrot.lane.b32.xlu0 %v634, 112
  %v640 = vpop.permute.xlu0 %639
  %v641 = vsel %vm323, %v638, 0
  %v643 = vsel %vm323, %v640, 0
  %645 = vmatprep.subr.mxu0 0.0
  %646 = vmatpush1.xpose.msra.mxu0 0.0
  %647 = vmatprep.subr.mxu0 0.0
  %648 = vmatpush1.xpose.msra.mxu0 0.0
  %649 = vmatprep.subr.mxu0 0.0
  %650 = vmatpush1.xpose.msra.mxu0 0.0
  %651 = vmatprep.subr.mxu0 0.0
  %652 = vmatpush1.xpose.msra.mxu0 0.0
  %653 = vmatprep.subr.mxu0 0.0
  %654 = vmatpush1.xpose.msra.mxu0 0.0
  %655 = vmatprep.subr.mxu0 0.0
  %656 = vmatpush1.xpose.msra.mxu0 0.0
  %657 = vmatprep.subr.mxu0 0.0
  %658 = vmatpush1.xpose.msra.mxu0 0.0
  %659 = vmatprep.subr.mxu0 0.0
  %660 = vmatpush1.xpose.msra.mxu0 0.0
  %661 = vmatprep.subr.mxu0 0.0
  %662 = vmatpush1.xpose.msra.mxu0 0.0
  %663 = vmatprep.subr.mxu0 0.0
  %664 = vmatpush1.xpose.msra.mxu0 0.0
  %665 = vmatprep.subr.mxu0 0.0
  %666 = vmatpush1.xpose.msra.mxu0 0.0
  %667 = vmatprep.subr.mxu0 0.0
  %668 = vmatpush1.xpose.msra.mxu0 0.0
  %669 = vmatprep.subr.mxu0 0.0
  %670 = vmatpush1.xpose.msra.mxu0 0.0
  %671 = vmatprep.subr.mxu0 0.0
  %672 = vmatpush1.xpose.msra.mxu0 0.0
  %673 = vmatprep.subr.mxu0 0.0
  %674 = vmatpush1.xpose.msra.mxu0 %v643
  %675 = vmatprep.subr.mxu0 0.0
  %676 = vmatpush1.xpose.msra.mxu0 %v641
  %677 = vmatprep.subr.mxu0 0.0
  %678 = vmatpush2.xpose.msra.mxu0 0.0
  %679 = vmatprep.subr.mxu0 0.0
  %680 = vmatpush2.xpose.msra.mxu0 0.0
  %681 = vmatprep.subr.mxu0 0.0
  %682 = vmatpush2.xpose.msra.mxu0 0.0
  %683 = vmatprep.subr.mxu0 0.0
  %684 = vmatpush2.xpose.msra.mxu0 0.0
  %685 = vmatprep.subr.mxu0 0.0
  %686 = vmatpush2.xpose.msra.mxu0 0.0
  %687 = vmatprep.subr.mxu0 0.0
  %688 = vmatpush2.xpose.msra.mxu0 0.0
  %689 = vmatprep.subr.mxu0 0.0
  %690 = vmatpush2.xpose.msra.mxu0 0.0
  %691 = vmatprep.subr.mxu0 0.0
  %692 = vmatpush2.xpose.msra.mxu0 0.0
  %693 = vmatprep.subr.mxu0 0.0
  %694 = vmatpush2.xpose.msra.mxu0 0.0
  %695 = vmatprep.subr.mxu0 0.0
  %696 = vmatpush2.xpose.msra.mxu0 0.0
  %697 = vmatprep.subr.mxu0 0.0
  %698 = vmatpush2.xpose.msra.mxu0 0.0
  %699 = vmatprep.subr.mxu0 0.0
  %700 = vmatpush2.xpose.msra.mxu0 0.0
  %701 = vmatprep.subr.mxu0 0.0
  %702 = vmatpush2.xpose.msra.mxu0 0.0
  %703 = vmatprep.subr.mxu0 0.0
  %704 = vmatpush2.xpose.msra.mxu0 0.0
  %705 = vmatprep.subr.mxu0 0.0
  %706 = vmatpush2.xpose.msra.mxu0 0.0
  %707 = vmatprep.subr.mxu0 0.0
  %708 = vmatpush2.xpose.msra.mxu0 0.0
  %709 = vmatprep.mubr.f32.mxu0 0.0
  %710 = vmatmul.mubr.f32.gmra.mxu0 %v548
  %v711 = vpop.f32.mrf.mxu0
  %v712 = vadd.f32 0.0, %v711
  %v713 = vpop.f32.mrf.mxu0
  %714 = vdwg.mxu0
  %v715 = vmul.f32 %v712, 0.5
  %v716 = vadd.f32 %v715, %v528
  %v717 = vmax.f32 %v716, 0.0
  %719 = vrot.lane.b32.xlu0 %v717, 124
  %v720 = vpop.permute.xlu0 %719
  %v722 = vadd.f32 %v717, %v720
  %723 = vrot.lane.b32.xlu0 %v717, 120
  %v724 = vpop.permute.xlu0 %723
  %v726 = vadd.f32 %v722, %v724
  %727 = vrot.lane.b32.xlu0 %v717, 116
  %v728 = vpop.permute.xlu0 %727
  %v730 = vadd.f32 %v726, %v728
  %v731 = vadd.f32 %v730, %v622
  %vm732 = vcmask 31744
  %v733 = vsel %vm732, %v544, -inf
  %734 = vmax.xlane.f32.xlu0 %v733
  %v735 = vpop.xlane.xlu0 %734
  %v736 = vsel %vm732, %v731, -inf
  %737 = vmax.xlane.f32.xlu0 %v736
  %v738 = vpop.xlane.xlu0 %737
  %vm739 = vcmp.eq.f32.partialorder %v544, %v735
  %vm740 = vcmp.eq.f32.partialorder %v731, %v738
  %v741 = vsel %vm739, %v19, 4
  %v742 = vsel %vm740, %v19, 4
  %v743 = vsel %vm732, %v741, 2147483647
  %v744 = vand.u32 %v743, 65535
  %v745 = vshra.s32 %v743, 16
  %v746 = vcvt.s32.f32 %v744
  %v747 = vcvt.s32.f32 %v745
  %748 = vmin.xlane.f32.xlu0 %v747
  %v749 = vpop.xlane.xlu0 %748
  %vm750 = vcmp.eq.f32.partialorder %v747, %v749
  %v751 = vsel %vm750, %v746, inf
  %752 = vmin.xlane.f32.xlu0 %v751
  %v753 = vpop.xlane.xlu0 %752
  %v754 = vcvt.f32.s32 %v753
  %v755 = vcvt.f32.s32 %v749
  %v756 = vshll.u32 %v755, 16
  %v757 = vadd.s32 %v756, %v754
  %v758 = vsel %vm732, %v742, 2147483647
  %v759 = vand.u32 %v758, 65535
  %v760 = vshra.s32 %v758, 16
  %v761 = vcvt.s32.f32 %v759
  %v762 = vcvt.s32.f32 %v760
  %763 = vmin.xlane.f32.xlu0 %v762
  %v764 = vpop.xlane.xlu0 %763
  %vm765 = vcmp.eq.f32.partialorder %v762, %v764
  %v766 = vsel %vm765, %v761, inf
  %767 = vmin.xlane.f32.xlu0 %v766
  %v768 = vpop.xlane.xlu0 %767
  %v769 = vcvt.f32.s32 %v768
  %v770 = vcvt.f32.s32 %v764
  %v771 = vshll.u32 %v770, 16
  %v772 = vadd.s32 %v771, %v769
  %vm773 = vcmp.eq.s32.totalorder %v19, %v757
  %vm774 = vcmp.eq.s32.totalorder %v19, %v772
  %v775 = vsel %vm773, -inf, %v544
  %v776 = vsel %vm774, -inf, %v731
  %v777 = vsel %vm732, %v775, -inf
  %778 = vmax.xlane.f32.xlu0 %v777
  %v779 = vpop.xlane.xlu0 %778
  %v780 = vsel %vm732, %v776, -inf
  %781 = vmax.xlane.f32.xlu0 %v780
  %v782 = vpop.xlane.xlu0 %781
  %vm783 = vcmp.eq.f32.partialorder %v775, %v779
  %vm784 = vcmp.eq.f32.partialorder %v776, %v782
  %v785 = vsel %vm783, %v19, 4
  %v786 = vsel %vm784, %v19, 4
  %v787 = vsel %vm732, %v785, 2147483647
  %v788 = vand.u32 %v787, 65535
  %v789 = vshra.s32 %v787, 16
  %v790 = vcvt.s32.f32 %v788
  %v791 = vcvt.s32.f32 %v789
  %792 = vmin.xlane.f32.xlu0 %v791
  %v793 = vpop.xlane.xlu0 %792
  %vm794 = vcmp.eq.f32.partialorder %v791, %v793
  %v795 = vsel %vm794, %v790, inf
  %796 = vmin.xlane.f32.xlu0 %v795
  %v797 = vpop.xlane.xlu0 %796
  %v798 = vcvt.f32.s32 %v797
  %v799 = vcvt.f32.s32 %v793
  %v800 = vshll.u32 %v799, 16
  %v801 = vadd.s32 %v800, %v798
  %v802 = vsel %vm732, %v786, 2147483647
  %v803 = vand.u32 %v802, 65535
  %v804 = vshra.s32 %v802, 16
  %v805 = vcvt.s32.f32 %v803
  %v806 = vcvt.s32.f32 %v804
  %807 = vmin.xlane.f32.xlu0 %v806
  %v808 = vpop.xlane.xlu0 %807
  %vm809 = vcmp.eq.f32.partialorder %v806, %v808
  %v810 = vsel %vm809, %v805, inf
  %811 = vmin.xlane.f32.xlu0 %v810
  %v812 = vpop.xlane.xlu0 %811
  %v813 = vcvt.f32.s32 %v812
  %v814 = vcvt.f32.s32 %v808
  %v815 = vshll.u32 %v814, 16
  %v816 = vadd.s32 %v815, %v813
  %vm817 = vcmp.eq.s32.totalorder %v19, %v801
  %vm818 = vcmp.eq.s32.totalorder %v19, %v816
  %vm819 = vmor %vm773, %vm817
  %vm820 = vmor %vm774, %vm818
  %v821 = vsel %vm819, %v544, 0.0
  %v822 = vsel %vm820, %v731, 0.0
  %823 = vst.msk [vmem:[%s3] sm:$0xff] %vm732, %v821
  %824 = vst.msk [vmem:[%s3 + $0x8] sm:$0xff] %vm732, %v822
  // Predicated region
  $region14: #{incremental_graph_constructor.1} parent=0 // pred_check
    _
  $region15: #{incremental_graph_constructor.1} parent=0 // pred_check_branch
    %826 = sbr.rel (0) target = $region17
  $region16: #{incremental_graph_constructor.1} parent=0 // pred_region
    _
  $region17: #{incremental_graph_constructor.1} parent=0 // pred_fallthru
    _
  // Predicated region
  $region18: #{incremental_graph_constructor.1} parent=0 // pred_check
    _
  $region19: #{incremental_graph_constructor.1} parent=0 // pred_check_branch
    %828 = sbr.rel (0) target = $region21
  $region20: #{incremental_graph_constructor.1} parent=0 // pred_region
    _
  $region21: #{incremental_graph_constructor.1} parent=0 // pred_fallthru
    _

</llo_original>
